<compile_context>
chip_gen: v6e
topology: v6e:2x2x1
jax: 0.10.0
libtpu: 0.0.40
codegen_flags: <defaults>
</compile_context>

<pallas_src>
import math

import jax
import jax.numpy as jnp
from jax.experimental import pallas as pl
from jax.experimental.pallas import tpu as pltpu


def _round_up(x: int, m: int) -> int:
    return ((x + m - 1) // m) * m


def _target_tile_bytes() -> int:
    """Per-generation x-tile budget, conservative w.r.t. the scoped-VMEM default."""
    try:
        kind = jax.devices()[0].device_kind.lower()
    except Exception:
        kind = ""
    # v6e / v7x: 32 MiB scoped default (and much faster HBM) -> 4 MiB tiles
    # (~24 MiB double-buffered x/pe/out footprint).
    if ("v6" in kind) or ("v7" in kind):
        return 4 * 1024 * 1024
    # v5e and older: 16 MiB scoped-VMEM default -> 2 MiB tiles (~12 MiB footprint).
    return 2 * 1024 * 1024


def make_positional_encoding(input_dim: int, max_len: int = 5000,
                             dtype=jnp.float32) -> jnp.ndarray:
    """Build the sinusoidal table once (matches the torch code). Build it in the
    model dtype so the forward pass never has to re-cast the full table."""
    assert input_dim % 2 == 0, "PositionalEncoding requires an even input_dim"
    position = jnp.arange(0, max_len, dtype=jnp.float32)[:, None]          # (L, 1)
    div_term = jnp.exp(
        jnp.arange(0, input_dim, 2, dtype=jnp.float32)
        * -(math.log(10000.0) / input_dim)
    )                                                                       # (D/2,)
    angles = position * div_term                                            # (L, D/2)
    pe = jnp.zeros((max_len, input_dim), dtype=jnp.float32)
    pe = pe.at[:, 0::2].set(jnp.sin(angles))
    pe = pe.at[:, 1::2].set(jnp.cos(angles))
    return pe.astype(dtype)                                                 # (L, D)


def _add_pe_seq_kernel(x_ref, pe_ref, o_ref):
    # x_ref / o_ref: (TS, D) blocks (batch dim squeezed); pe_ref: (TS, D).
    o_ref[...] = x_ref[...] + pe_ref[...]


def _add_pe_flat_kernel(x_ref, pe_ref, o_ref):
    # x_ref / o_ref: (B, TC) lane-dense slab; pe_ref: (1, TC) broadcast over batch.
    o_ref[...] = x_ref[...] + pe_ref[...]


def positional_encoding_forward(x: jnp.ndarray, pe_full: jnp.ndarray,
                                *, donate_x: bool = False) -> jnp.ndarray:
    """x: (B, S, D); pe_full: (max_len, D). Returns x + pe_full[None, :S, :]."""
    B, S, D = x.shape
    max_len = pe_full.shape[0]
    assert S <= max_len, f"sequence length {S} exceeds positional table {max_len}"

    if pe_full.dtype != x.dtype:
        # Fallback only: prefer building/caching the table in the model dtype
        # (make_positional_encoding(dtype=...)) so this full-table convert
        # never runs in the hot path.
        pe_full = pe_full.astype(x.dtype)

    itemsize = jnp.dtype(x.dtype).itemsize
    sub = max(8, 32 // itemsize)        # native packed sublane tile: 8 f32 / 16 bf16 / 32 i8
    tile_bytes = _target_tile_bytes()
    io_alias = {0: 0} if donate_x else {}
    cost = pl.CostEstimate(
        flops=B * S * D,
        transcendentals=0,
        bytes_accessed=(2 * B * S * D + S * D) * itemsize,
    )

    if D % 128 == 0:
        # ---- 3-D path: lane-dense feature dim; tile the sequence axis. ----
        ts = max(sub, (tile_bytes // (D * itemsize)) // sub * sub)
        TS = min(ts, _round_up(S, sub))     # always a sublane multiple; edge tile masked
        grid = (pl.cdiv(S, TS), B)          # batch innermost -> pe tile stays resident

        return pl.pallas_call(
            _add_pe_seq_kernel,
            out_shape=jax.ShapeDtypeStruct((B, S, D), x.dtype),
            grid_spec=pltpu.PrefetchScalarGridSpec(
                num_scalar_prefetch=0,
                grid=grid,
                in_specs=[
                    pl.BlockSpec((pl.Squeezed(), TS, D), lambda s, b: (b, s, 0)),
                    # Window straight into the full (max_len, D) table: no pe[:S] copy.
                    pl.BlockSpec((TS, D), lambda s, b: (s, 0)),
                ],
                out_specs=pl.BlockSpec((pl.Squeezed(), TS, D), lambda s, b: (b, s, 0)),
            ),
            compiler_params=pltpu.CompilerParams(
                # No accumulator: both axes independent. Lets v7x shard batch
                # across its two TensorCores; no effect on v5e/v6e.
                dimension_semantics=("parallel", "parallel"),
            ),
            cost_estimate=cost,
            input_output_aliases=io_alias,
        )(x, pe_full)

    # ---- 2-D lane-dense path (D < 128 or not a multiple of 128). ----
    N = S * D
    x2 = x.reshape(B, N)
    # Contiguous, zero-copy reshape of the FULL table; the flatten of pe[:S]
    # is a prefix of the flatten of pe (row-major), so windowing the first N
    # columns gives exactly the needed bytes -> no per-call S*D copy.
    pe2 = pe_full.reshape(1, max_len * D)
    tc = max(128, (tile_bytes // (B * itemsize)) // 128 * 128)
    TC = min(tc, _round_up(N, 128))         # lane multiple; edge tile masked
    grid = (pl.cdiv(N, TC),)

    out2 = pl.pallas_call(
        _add_pe_flat_kernel,
        out_shape=jax.ShapeDtypeStruct((B, N), x.dtype),
        grid_spec=pltpu.PrefetchScalarGridSpec(
            num_scalar_prefetch=0,
            grid=grid,
            in_specs=[
                pl.BlockSpec((B, TC), lambda c: (0, c)),
                pl.BlockSpec((1, TC), lambda c: (0, c)),
            ],
            out_specs=pl.BlockSpec((B, TC), lambda c: (0, c)),
        ),
        compiler_params=pltpu.CompilerParams(
            dimension_semantics=("parallel",),
        ),
        cost_estimate=cost,
        input_output_aliases=io_alias,
    )(x2, pe2)
    return out2.reshape(B, S, D)


if __name__ == "__main__":
    MAX_LEN = 64  # small max_len for the synthetic test (module default is 5000)
    key = jax.random.PRNGKey(0)
    k1, k2, k3 = jax.random.split(key, 3)

    # Case 1: D < 128 -> lane-dense flattened path (full-table window).
    B, S, D = 2, 8, 32
    x = jax.random.normal(k1, (B, S, D), dtype=jnp.float32)
    pe_full = make_positional_encoding(D, MAX_LEN, dtype=jnp.float32)
    out = jax.block_until_ready(positional_encoding_forward(x, pe_full))
    ref = x + pe_full[None, :S, :]
    assert out.shape == (B, S, D)
    assert jnp.allclose(out, ref, atol=1e-6), "flat-path mismatch vs reference"

    # Case 2: D multiple of 128, S a sublane multiple -> exact sequence tiles.
    B2, S2, D2 = 2, 16, 128
    x2 = jax.random.normal(k2, (B2, S2, D2), dtype=jnp.float32)
    pe_full2 = make_positional_encoding(D2, MAX_LEN, dtype=jnp.float32)
    out2 = jax.block_until_ready(positional_encoding_forward(x2, pe_full2))
    ref2 = x2 + pe_full2[None, :S2, :]
    assert out2.shape == (B2, S2, D2)
    assert jnp.allclose(out2, ref2, atol=1e-6), "seq-path mismatch vs reference"

    # Case 3: bf16 table built in model dtype, ragged S -> dtype-aware sublane
    # rounding + masked edge tile (no wrapper-side pe[:S] copy).
    B3, S3, D3 = 2, 13, 128
    x3 = jax.random.normal(k3, (B3, S3, D3), dtype=jnp.float32).astype(jnp.bfloat16)
    pe_full3 = make_positional_encoding(D3, MAX_LEN, dtype=jnp.bfloat16)
    out3 = jax.block_until_ready(positional_encoding_forward(x3, pe_full3))
    ref3 = x3 + pe_full3[None, :S3, :]
    assert out3.shape == (B3, S3, D3)
    assert jnp.allclose(out3.astype(jnp.float32), ref3.astype(jnp.float32),
                        atol=1e-2), "bf16-path mismatch vs reference"

    print("KERNEL_OK")
</pallas_src>

<mosaic_0001>
module attributes {stable_mosaic.version = 11 : i64} {
  func.func @_add_pe_flat_kernel(%arg0: i32, %arg1: memref<2x256xf32, #tpu.memory_space<vmem>>, %arg2: memref<1x256xf32, #tpu.memory_space<vmem>>, %arg3: memref<2x256xf32, #tpu.memory_space<vmem>>) attributes {dimension_semantics = [#tpu.dimension_semantics<parallel>], iteration_bounds = array<i64: 1>, scalar_prefetch = 0 : i64, scratch_operands = 0 : i64, tpu.core_type = #tpu.core_type<tc>, window_params = [{transform_indices = @transform_0, window_bounds = array<i64: 2, 256>}, {transform_indices = @transform_1, window_bounds = array<i64: 1, 256>}, {transform_indices = @transform_2, window_bounds = array<i64: 2, 256>}]} {
    %c0 = arith.constant 0 : index
    %c0_0 = arith.constant 0 : index
    %0 = vector.load %arg1[%c0, %c0_0] : memref<2x256xf32, #tpu.memory_space<vmem>>, vector<2x256xf32>
    %c0_1 = arith.constant 0 : index
    %c0_2 = arith.constant 0 : index
    %1 = vector.load %arg2[%c0_1, %c0_2] : memref<1x256xf32, #tpu.memory_space<vmem>>, vector<1x256xf32>
    %2 = vector.broadcast %1 : vector<1x256xf32> to vector<2x256xf32>
    %3 = arith.addf %0, %2 : vector<2x256xf32>
    %c0_3 = arith.constant 0 : index
    %c0_4 = arith.constant 0 : index
    %4 = vector.load %arg3[%c0_3, %c0_4] : memref<2x256xf32, #tpu.memory_space<vmem>>, vector<2x256xf32>
    tpu.vector_store %arg3[%c0_3, %c0_4], %3 {strides = array<i32>} : memref<2x256xf32, #tpu.memory_space<vmem>>, vector<2x256xf32>,
    return
  }
  func.func @transform_0(%arg0: i32) -> (i32, i32) {
    %c0_i32 = arith.constant 0 : i32
    %c0_i32_0 = arith.constant 0 : i32
    return %c0_i32, %arg0 : i32, i32
  }
  func.func @transform_1(%arg0: i32) -> (i32, i32) {
    %c0_i32 = arith.constant 0 : i32
    %c0_i32_0 = arith.constant 0 : i32
    return %c0_i32, %arg0 : i32, i32
  }
  func.func @transform_2(%arg0: i32) -> (i32, i32) {
    %c0_i32 = arith.constant 0 : i32
    %c0_i32_0 = arith.constant 0 : i32
    return %c0_i32, %arg0 : i32, i32
  }
}

</mosaic_0001>

<llo_original>
// kernel: tpu_custom_call.1
$region0: #{tpu_custom_call.1}
  #allocation0 [shape = 'u32[]', space=smem, size = 0x4, offset = 0x4, fixed_abs, tag = 'smem constant byte address 0x4 - core index']
  #allocation1 [shape = 'u32[144,128]{1,0:T(1,128)}', space=vmem, size = 0x12000, scoped, tag = 'internal scratch']
  %s0 = inlined_call_operand.hbm [shape: f32[2,256], index: 0, kind: input, shape index: {}]
  %s1 = inlined_call_operand.hbm [shape: f32[1,2048], index: 1, kind: input, shape index: {}]
  %s2 = inlined_call_operand.hbm [shape: f32[2,256], index: 2, kind: output, shape index: {}]
  %s3 = sld [smem:[#allocation0]]
  $region26: #{tpu_custom_call.1} parent=0
    _
  %s5 = ssub.s32 1, %s3
  %s6 = scalar_select 0, %s5, %s3
  $region1: #{tpu_custom_call.1} parent=0
    #allocation2 [shape = 'u8[2048]{0}', space=vmem, size = 0x800, scoped, tag = 'input window, operand 0, single buffered']
    #allocation3 [shape = 's32[1]{0}', space=sflag, size = 0x4, scoped, tag = 'scoped memory for tpu_custom_call.1']
    #allocation4 [shape = 's32[1]{0}', space=sflag, size = 0x4, scoped, tag = 'scoped memory for tpu_custom_call.1']
    #allocation5 [shape = 'u8[1024]{0}', space=vmem, size = 0x400, scoped, tag = 'input window, operand 1, single buffered']
    #allocation6 [shape = 's32[1]{0}', space=sflag, size = 0x4, scoped, tag = 'scoped memory for tpu_custom_call.1']
    #allocation7 [shape = 'u8[2048]{0}', space=vmem, size = 0x800, scoped, tag = 'output window, operand 0, single buffered']
    %7 = vsyncpa [#allocation3], 0
    %8 = vsyncpa [#allocation6], 0
    %9 = vsyncpa [#allocation4], 0
    // Predicated region
    $region2: #{tpu_custom_call.1} parent=1 // pred_check
      _
    $region3: #{tpu_custom_call.1} parent=1 // pred_check_branch
      %11 = sbr.rel (0) target = $region5
    $region4: #{tpu_custom_call.1} parent=1 // pred_region
      %s13 = ssub.s32 64, 64
      %14 = vsyncadd [#allocation3], %s13
      %s16 = sshll.u32 [#allocation2], 4
      %s17 = int_to_ptr.vmem [resolvable:$true] %s16
      %19 = dma.hbm_to_vmem [thread:$0]  %s0, 64, %s17, [#allocation3]
    $region5: #{tpu_custom_call.1} parent=1 // pred_fallthru
      _
    // Predicated region
    $region6: #{tpu_custom_call.1} parent=1 // pred_check
      _
    $region7: #{tpu_custom_call.1} parent=1 // pred_check_branch
      %21 = sbr.rel (0) target = $region9
    $region8: #{tpu_custom_call.1} parent=1 // pred_region
      %s23 = ssub.s32 32, 32
      %24 = vsyncadd [#allocation6], %s23
      %s26 = sshll.u32 [#allocation5], 4
      %s27 = int_to_ptr.vmem [resolvable:$true] %s26
      %29 = dma.hbm_to_vmem [thread:$0]  %s1, 32, %s27, [#allocation6]
    $region9: #{tpu_custom_call.1} parent=1 // pred_fallthru
      _
    // Predicated region
    $region10: #{tpu_custom_call.1} parent=1 // pred_check
      _
    $region11: #{tpu_custom_call.1} parent=1 // pred_check_branch
      %31 = sbr.rel (0) target = $region13
    $region12: #{tpu_custom_call.1} parent=1 // pred_region
      %32 = dma.done [#allocation3], 64
    $region13: #{tpu_custom_call.1} parent=1 // pred_fallthru
      _
    // Predicated region
    $region14: #{tpu_custom_call.1} parent=1 // pred_check
      _
    $region15: #{tpu_custom_call.1} parent=1 // pred_check_branch
      %34 = sbr.rel (0) target = $region17
    $region16: #{tpu_custom_call.1} parent=1 // pred_region
      %35 = dma.done [#allocation6], 32
    $region17: #{tpu_custom_call.1} parent=1 // pred_fallthru
      _
    %v36 = vld [vmem:[#allocation2] sm:$0xf]
    %v37 = vld [vmem:[#allocation5] sm:$0x3]
    %v39 = vlaneseq
    %v40 = vshrl.u32 %v39, 7
    %v41 = vsub.s32 0, %v40
    %v42 = vrot.slane %v37, %v41
    %v43 = vlaneseq
    %v44 = vshrl.u32 %v43, 7
    %v45 = vsub.s32 1, %v44
    %v46 = vrot.slane %v37, %v45
    %v47 = vcombine.low %v42, %v46
    %v49 = vunpack.c.l.s4 1983009808
    %v50 = vunpack.c.0.s8 %v49
    %v51 = vlaneseq
    %v52 = vshrl.u32 %v51, 7
    %v53 = vsub.s32 %v50, %v52
    %v54 = vrot.slane %v47, %v53
    %v56 = vadd.f32 %v36, %v54
    %57 = vst [vmem:[#allocation7] sm:$0xf] %v56
    // Predicated region
    $region18: #{tpu_custom_call.1} parent=1 // pred_check
      _
    $region19: #{tpu_custom_call.1} parent=1 // pred_check_branch
      %59 = sbr.rel (0) target = $region21
    $region20: #{tpu_custom_call.1} parent=1 // pred_region
      %s61 = ssub.s32 64, 64
      %62 = vsyncadd [#allocation4], %s61
      %s64 = sshll.u32 [#allocation7], 4
      %s65 = int_to_ptr.vmem [resolvable:$true] %s64
      %67 = dma.vmem_to_hbm [thread:$0]  %s65, 64, %s2, [#allocation4]
    $region21: #{tpu_custom_call.1} parent=1 // pred_fallthru
      _
    // Predicated region
    $region22: #{tpu_custom_call.1} parent=1 // pred_check
      _
    $region23: #{tpu_custom_call.1} parent=1 // pred_check_branch
      %69 = sbr.rel (0) target = $region25
    $region24: #{tpu_custom_call.1} parent=1 // pred_region
      %70 = dma.done [#allocation4], 64
    $region25: #{tpu_custom_call.1} parent=1 // pred_fallthru
      _
    %71 = vsyncpa [#allocation3], 1
    %72 = vsyncpa [#allocation6], 1
    %73 = vsyncpa [#allocation4], 1

</llo_original>
